<compile_context>
chip_gen: v6e
topology: v6e:2x2x1
jax: 0.10.0
libtpu: 0.0.40
codegen_flags: <defaults>
</compile_context>

<pallas_src>
import jax
import jax.numpy as jnp
from jax.experimental import pallas as pl
from jax.experimental.pallas import tpu as pltpu


def _edgeconv_kernel(xw_ref, idx_i_ref, idx_j_ref, b_ref, o_ref):
    # xw_ref:    (Bb, 2*Np, Cp) bf16  pre-projected nodes:
    #                                 rows [0, Np)   = x @ (W1 - W2)   (x_i term)
    #                                 rows [Np, 2Np) = x @ W2          (x_j term)
    # idx_i_ref: (Bb, tn, K) int32    center indices   (edge_index[1])
    # idx_j_ref: (Bb, tn, K) int32    neighbor indices (edge_index[0])
    # b_ref:     (1, Cp)   f32        bias (lane-padded)
    # o_ref:     (Bb, tn, Cp) f32
    xw = xw_ref[...]                                   # (Bb, 2Np, Cp) bf16
    two_np = xw.shape[1]
    np_nodes = two_np // 2

    idx_i = idx_i_ref[...]                             # (Bb, tn, K) int32
    idx_j = idx_j_ref[...] + np_nodes                  # offset into second half
    bb, tn, K = idx_i.shape

    iota2 = jax.lax.broadcasted_iota(jnp.int32, (bb, tn, two_np), 2)

    # In-VMEM gather via one fused one-hot matmul per neighbor k, with a
    # running max over K (no (tn, K, Cout) intermediate, no reshapes).
    # TODO(synk): if the KNN construction guarantees edge_index[1][b,n,:]==n,
    # the center half of the one-hot could be replaced by a plain row slice.
    acc = None
    for k in range(K):                                 # K static & small -> unrolled
        hit = (idx_i[:, :, k:k + 1] == iota2) | (idx_j[:, :, k:k + 1] == iota2)
        oh = jnp.where(hit, 1.0, 0.0).astype(jnp.bfloat16)      # exact 0/1 one-hot
        yk = jnp.einsum('bns,bso->bno', oh, xw,
                        preferred_element_type=jnp.float32)      # (Bb, tn, Cp) f32
        acc = yk if acc is None else jnp.maximum(acc, yk)

    # bias + ReLU AFTER the K-max (equivalent: ReLU monotone, bias const over K).
    o_ref[...] = jnp.maximum(acc + b_ref[...][None], 0.0).astype(o_ref.dtype)


def edge_graph_conv2d(x, edge_index, w, b, *, tn=None, bb=None):
    """GraphConv2d(conv='edge') forward.

    x:          (B, C, N, 1) float32
    edge_index: (2, B, N, K) int32   [1] = center idx, [0] = neighbor idx
    w:          (Cout, 2*C)  1x1 conv weight (squeezed)
    b:          (Cout,)      conv bias
    returns     (B, Cout, N, 1) float32
    """
    B, C, N, _ = x.shape
    K = edge_index.shape[-1]
    Cout = w.shape[0]

    # --- tiling -------------------------------------------------------------
    Cp = ((Cout + 127) // 128) * 128              # lane-dense output channels
    if tn is None:
        tn = min(N, 128)                          # node tile (sublane multiple)
    tn = max(8, ((min(tn, N) + 7) // 8) * 8)
    Np = ((N + tn - 1) // tn) * tn                # pad node axis -> no dropped tail
    tn = min(tn, Np)
    if bb is None:                                # batch/window block per grid step
        bb = max(1, min(32, 2048 // Np))
    bb = max(1, min(bb, B))
    Bp = ((B + bb - 1) // bb) * bb

    # --- projection hoisted out of the kernel (matmul-before-gather) --------
    x_nc = jnp.transpose(x[..., 0], (0, 2, 1)).astype(jnp.float32)    # (B, N, C)
    w1 = w[:, :C].astype(jnp.float32)                                  # (Cout, C)
    w2 = w[:, C:].astype(jnp.float32)
    # weight fold: W @ [x_i ; x_j - x_i] = (W1 - W2) @ x_i + W2 @ x_j
    w1p = jnp.pad(jnp.transpose(w1 - w2), ((0, 0), (0, Cp - Cout)))    # (C, Cp)
    w2t = jnp.pad(jnp.transpose(w2), ((0, 0), (0, Cp - Cout)))         # (C, Cp)
    xw1 = jnp.einsum('bnc,co->bno', x_nc, w1p)                         # (B, N, Cp)
    xw2 = jnp.einsum('bnc,co->bno', x_nc, w2t)

    pad_n = Np - N
    pad_b = Bp - B
    if pad_n or pad_b:
        xw1 = jnp.pad(xw1, ((0, pad_b), (0, pad_n), (0, 0)))
        xw2 = jnp.pad(xw2, ((0, pad_b), (0, pad_n), (0, 0)))
    # fused gather operand: [xw1 ; xw2] stacked along the node axis, bf16 for MXU
    xw_cat = jnp.concatenate([xw1, xw2], axis=1).astype(jnp.bfloat16)  # (Bp, 2Np, Cp)

    idx_i = edge_index[1].astype(jnp.int32)                            # (B, N, K)
    idx_j = edge_index[0].astype(jnp.int32)
    if pad_n or pad_b:
        idx_i = jnp.pad(idx_i, ((0, pad_b), (0, pad_n), (0, 0)))   # padded rows gather
        idx_j = jnp.pad(idx_j, ((0, pad_b), (0, pad_n), (0, 0)))   # node 0 (sliced off)

    b2 = jnp.pad(b.reshape(1, Cout).astype(jnp.float32), ((0, 0), (0, Cp - Cout)))

    grid = (Bp // bb, Np // tn)
    out = pl.pallas_call(
        _edgeconv_kernel,
        out_shape=jax.ShapeDtypeStruct((Bp, Np, Cp), jnp.float32),
        grid=grid,
        in_specs=[
            # full projected node slab for this batch block (reused across node tiles)
            pl.BlockSpec((bb, 2 * Np, Cp), lambda bi, ni: (bi, 0, 0)),
            pl.BlockSpec((bb, tn, K), lambda bi, ni: (bi, ni, 0)),
            pl.BlockSpec((bb, tn, K), lambda bi, ni: (bi, ni, 0)),
            pl.BlockSpec((1, Cp), lambda bi, ni: (0, 0)),
        ],
        out_specs=pl.BlockSpec((bb, tn, Cp), lambda bi, ni: (bi, ni, 0)),
        compiler_params=pltpu.CompilerParams(
            dimension_semantics=("parallel", "parallel"),
            # small resident set; 32 MiB scoped limit is safe on every
            # generation incl. v7x's 64 MiB physical VMEM (double-buffered).
            vmem_limit_bytes=32 * 1024 * 1024,
        ),
    )(xw_cat, idx_i, idx_j, b2)                       # (Bp, Np, Cp)

    out = out[:B, :N, :Cout]                          # drop batch/node/channel padding
    # back to PyTorch layout (B, Cout, N, 1)
    return jnp.transpose(out, (0, 2, 1))[..., None]


def _reference(x, edge_index, w, b):
    """Pure-JAX reference mirroring the PyTorch EdgeConv2d forward exactly."""
    B, C, N, _ = x.shape
    x_nc = jnp.transpose(x[..., 0], (0, 2, 1))                # (B, N, C)
    bidx = jnp.arange(B)[:, None, None]
    x_i = x_nc[bidx, edge_index[1]]                           # (B, N, K, C)
    x_j = x_nc[bidx, edge_index[0]]
    feat = jnp.concatenate([x_i, x_j - x_i], axis=-1)         # (B, N, K, 2C)
    y = jnp.einsum("bnkc,oc->bnko", feat, w) + b
    y = jnp.maximum(y, 0.0)
    y = jnp.max(y, axis=2)                                    # (B, N, Cout)
    return jnp.transpose(y, (0, 2, 1))[..., None]


# TODO(synk): the surrounding WindowGrapher pieces (DenseDilatedKnnGraph top-k
# graph construction, fc1/fc2 Conv+BatchNorm, window partition/reverse + shift,
# DropPath + residual) stay as ordinary JAX/host ops; only the EdgeConv2d graph
# convolution core is kernelized here.

if __name__ == "__main__":
    B, C, N, K, Cout = 2, 4, 16, 8, 8      # in_channels=4 -> out = 2*in = 8, k=8

    key = jax.random.PRNGKey(0)
    kx, ke, kw, kb = jax.random.split(key, 4)

    x = jax.random.normal(kx, (B, C, N, 1), dtype=jnp.float32)
    edge_index = jax.random.randint(ke, (2, B, N, K), 0, N, dtype=jnp.int32)

    # deterministic Conv2d(2*C, Cout, 1, bias=True) parameters
    w = jax.random.normal(kw, (Cout, 2 * C), dtype=jnp.float32) * (1.0 / jnp.sqrt(2.0 * C))
    b = jax.random.normal(kb, (Cout,), dtype=jnp.float32) * 0.1

    out = edge_graph_conv2d(x, edge_index, w, b)
    out = jax.block_until_ready(out)

    ref = _reference(x, edge_index, w, b)
    assert out.shape == (B, Cout, N, 1)
    # bf16 MXU operands (f32 accumulation) -> relaxed tolerance vs f32 reference
    assert jnp.allclose(out, ref, atol=3e-2, rtol=3e-2), float(jnp.max(jnp.abs(out - ref)))

    print("KERNEL_OK")
</pallas_src>

<mosaic_0001>
module attributes {stable_mosaic.version = 11 : i64} {
  func.func @_edgeconv_kernel(%arg0: i32, %arg1: i32, %arg2: memref<2x32x128xbf16, #tpu.memory_space<vmem>>, %arg3: memref<2x16x8xi32, #tpu.memory_space<vmem>>, %arg4: memref<2x16x8xi32, #tpu.memory_space<vmem>>, %arg5: memref<1x128xf32, #tpu.memory_space<vmem>>, %arg6: memref<2x16x128xf32, #tpu.memory_space<vmem>>) attributes {dimension_semantics = [#tpu.dimension_semantics<parallel>, #tpu.dimension_semantics<parallel>], iteration_bounds = array<i64: 1, 1>, scalar_prefetch = 0 : i64, scratch_operands = 0 : i64, tpu.core_type = #tpu.core_type<tc>, window_params = [{transform_indices = @transform_0, window_bounds = array<i64: 2, 32, 128>}, {transform_indices = @transform_1, window_bounds = array<i64: 2, 16, 8>}, {transform_indices = @transform_2, window_bounds = array<i64: 2, 16, 8>}, {pipeline_mode = #tpu.pipeline_mode<synchronous>, transform_indices = @transform_3, window_bounds = array<i64: 1, 128>}, {transform_indices = @transform_4, window_bounds = array<i64: 2, 16, 128>}]} {
    %c0 = arith.constant 0 : index
    %c0_0 = arith.constant 0 : index
    %c0_1 = arith.constant 0 : index
    %0 = vector.load %arg2[%c0, %c0_0, %c0_1] : memref<2x32x128xbf16, #tpu.memory_space<vmem>>, vector<2x32x128xbf16>
    %c0_2 = arith.constant 0 : index
    %c0_3 = arith.constant 0 : index
    %c0_4 = arith.constant 0 : index
    %1 = vector.load %arg3[%c0_2, %c0_3, %c0_4] : memref<2x16x8xi32, #tpu.memory_space<vmem>>, vector<2x16x8xi32>
    %c0_5 = arith.constant 0 : index
    %c0_6 = arith.constant 0 : index
    %c0_7 = arith.constant 0 : index
    %2 = vector.load %arg4[%c0_5, %c0_6, %c0_7] : memref<2x16x8xi32, #tpu.memory_space<vmem>>, vector<2x16x8xi32>
    %c16_i32 = arith.constant 16 : i32
    %3 = vector.broadcast %c16_i32 : i32 to vector<2x16x8xi32>
    %4 = arith.addi %2, %3 : vector<2x16x8xi32>
    %5 = tpu.iota {dimensions = array<i32: 2>} : vector<2x16x32xi32>
    %6 = vector.extract_strided_slice %1 {offsets = [0, 0, 0], sizes = [2, 16, 1], strides = [1, 1, 1]} : vector<2x16x8xi32> to vector<2x16x1xi32>
    %7 = vector.broadcast %6 : vector<2x16x1xi32> to vector<2x16x32xi32>
    %8 = arith.cmpi eq, %7, %5 : vector<2x16x32xi32>
    %9 = vector.extract_strided_slice %4 {offsets = [0, 0, 0], sizes = [2, 16, 1], strides = [1, 1, 1]} : vector<2x16x8xi32> to vector<2x16x1xi32>
    %10 = vector.broadcast %9 : vector<2x16x1xi32> to vector<2x16x32xi32>
    %11 = arith.cmpi eq, %10, %5 : vector<2x16x32xi32>
    %12 = arith.ori %8, %11 : vector<2x16x32xi1>
    %cst = arith.constant 1.000000e+00 : f32
    %cst_8 = arith.constant 0.000000e+00 : f32
    %13 = vector.broadcast %cst : f32 to vector<2x16x32xf32>
    %14 = vector.broadcast %cst_8 : f32 to vector<2x16x32xf32>
    %15 = arith.select %12, %13, %14 : vector<2x16x32xi1>, vector<2x16x32xf32>
    %16 = arith.truncf %15 : vector<2x16x32xf32> to vector<2x16x32xbf16>
    "tpu.trace_start"() <{level = 10 : i32, message = "bns,bso->bno"}> : () -> ()
    %cst_9 = arith.constant dense<0.000000e+00> : vector<2x16x128xf32>
    %17 = tpu.matmul %16, %0, %cst_9 {dimension_numbers = #tpu.dot_dimension_numbers<[2], [1], [1], [2], [0, 0, 0, 1, 1, 2], [0], [0]>} : vector<2x16x32xbf16>, vector<2x32x128xbf16>, vector<2x16x128xf32> -> vector<2x16x128xf32>
    "tpu.trace_stop"() : () -> ()
    %18 = vector.extract_strided_slice %1 {offsets = [0, 0, 1], sizes = [2, 16, 1], strides = [1, 1, 1]} : vector<2x16x8xi32> to vector<2x16x1xi32>
    %19 = vector.broadcast %18 : vector<2x16x1xi32> to vector<2x16x32xi32>
    %20 = arith.cmpi eq, %19, %5 : vector<2x16x32xi32>
    %21 = vector.extract_strided_slice %4 {offsets = [0, 0, 1], sizes = [2, 16, 1], strides = [1, 1, 1]} : vector<2x16x8xi32> to vector<2x16x1xi32>
    %22 = vector.broadcast %21 : vector<2x16x1xi32> to vector<2x16x32xi32>
    %23 = arith.cmpi eq, %22, %5 : vector<2x16x32xi32>
    %24 = arith.ori %20, %23 : vector<2x16x32xi1>
    %cst_10 = arith.constant 1.000000e+00 : f32
    %cst_11 = arith.constant 0.000000e+00 : f32
    %25 = vector.broadcast %cst_10 : f32 to vector<2x16x32xf32>
    %26 = vector.broadcast %cst_11 : f32 to vector<2x16x32xf32>
    %27 = arith.select %24, %25, %26 : vector<2x16x32xi1>, vector<2x16x32xf32>
    %28 = arith.truncf %27 : vector<2x16x32xf32> to vector<2x16x32xbf16>
    "tpu.trace_start"() <{level = 10 : i32, message = "bns,bso->bno"}> : () -> ()
    %cst_12 = arith.constant dense<0.000000e+00> : vector<2x16x128xf32>
    %29 = tpu.matmul %28, %0, %cst_12 {dimension_numbers = #tpu.dot_dimension_numbers<[2], [1], [1], [2], [0, 0, 0, 1, 1, 2], [0], [0]>} : vector<2x16x32xbf16>, vector<2x32x128xbf16>, vector<2x16x128xf32> -> vector<2x16x128xf32>
    "tpu.trace_stop"() : () -> ()
    %30 = arith.maximumf %17, %29 : vector<2x16x128xf32>
    %31 = vector.extract_strided_slice %1 {offsets = [0, 0, 2], sizes = [2, 16, 1], strides = [1, 1, 1]} : vector<2x16x8xi32> to vector<2x16x1xi32>
    %32 = vector.broadcast %31 : vector<2x16x1xi32> to vector<2x16x32xi32>
    %33 = arith.cmpi eq, %32, %5 : vector<2x16x32xi32>
    %34 = vector.extract_strided_slice %4 {offsets = [0, 0, 2], sizes = [2, 16, 1], strides = [1, 1, 1]} : vector<2x16x8xi32> to vector<2x16x1xi32>
    %35 = vector.broadcast %34 : vector<2x16x1xi32> to vector<2x16x32xi32>
    %36 = arith.cmpi eq, %35, %5 : vector<2x16x32xi32>
    %37 = arith.ori %33, %36 : vector<2x16x32xi1>
    %cst_13 = arith.constant 1.000000e+00 : f32
    %cst_14 = arith.constant 0.000000e+00 : f32
    %38 = vector.broadcast %cst_13 : f32 to vector<2x16x32xf32>
    %39 = vector.broadcast %cst_14 : f32 to vector<2x16x32xf32>
    %40 = arith.select %37, %38, %39 : vector<2x16x32xi1>, vector<2x16x32xf32>
    %41 = arith.truncf %40 : vector<2x16x32xf32> to vector<2x16x32xbf16>
    "tpu.trace_start"() <{level = 10 : i32, message = "bns,bso->bno"}> : () -> ()
    %cst_15 = arith.constant dense<0.000000e+00> : vector<2x16x128xf32>
    %42 = tpu.matmul %41, %0, %cst_15 {dimension_numbers = #tpu.dot_dimension_numbers<[2], [1], [1], [2], [0, 0, 0, 1, 1, 2], [0], [0]>} : vector<2x16x32xbf16>, vector<2x32x128xbf16>, vector<2x16x128xf32> -> vector<2x16x128xf32>
    "tpu.trace_stop"() : () -> ()
    %43 = arith.maximumf %30, %42 : vector<2x16x128xf32>
    %44 = vector.extract_strided_slice %1 {offsets = [0, 0, 3], sizes = [2, 16, 1], strides = [1, 1, 1]} : vector<2x16x8xi32> to vector<2x16x1xi32>
    %45 = vector.broadcast %44 : vector<2x16x1xi32> to vector<2x16x32xi32>
    %46 = arith.cmpi eq, %45, %5 : vector<2x16x32xi32>
    %47 = vector.extract_strided_slice %4 {offsets = [0, 0, 3], sizes = [2, 16, 1], strides = [1, 1, 1]} : vector<2x16x8xi32> to vector<2x16x1xi32>
    %48 = vector.broadcast %47 : vector<2x16x1xi32> to vector<2x16x32xi32>
    %49 = arith.cmpi eq, %48, %5 : vector<2x16x32xi32>
    %50 = arith.ori %46, %49 : vector<2x16x32xi1>
    %cst_16 = arith.constant 1.000000e+00 : f32
    %cst_17 = arith.constant 0.000000e+00 : f32
    %51 = vector.broadcast %cst_16 : f32 to vector<2x16x32xf32>
    %52 = vector.broadcast %cst_17 : f32 to vector<2x16x32xf32>
    %53 = arith.select %50, %51, %52 : vector<2x16x32xi1>, vector<2x16x32xf32>
    %54 = arith.truncf %53 : vector<2x16x32xf32> to vector<2x16x32xbf16>
    "tpu.trace_start"() <{level = 10 : i32, message = "bns,bso->bno"}> : () -> ()
    %cst_18 = arith.constant dense<0.000000e+00> : vector<2x16x128xf32>
    %55 = tpu.matmul %54, %0, %cst_18 {dimension_numbers = #tpu.dot_dimension_numbers<[2], [1], [1], [2], [0, 0, 0, 1, 1, 2], [0], [0]>} : vector<2x16x32xbf16>, vector<2x32x128xbf16>, vector<2x16x128xf32> -> vector<2x16x128xf32>
    "tpu.trace_stop"() : () -> ()
    %56 = arith.maximumf %43, %55 : vector<2x16x128xf32>
    %57 = vector.extract_strided_slice %1 {offsets = [0, 0, 4], sizes = [2, 16, 1], strides = [1, 1, 1]} : vector<2x16x8xi32> to vector<2x16x1xi32>
    %58 = vector.broadcast %57 : vector<2x16x1xi32> to vector<2x16x32xi32>
    %59 = arith.cmpi eq, %58, %5 : vector<2x16x32xi32>
    %60 = vector.extract_strided_slice %4 {offsets = [0, 0, 4], sizes = [2, 16, 1], strides = [1, 1, 1]} : vector<2x16x8xi32> to vector<2x16x1xi32>
    %61 = vector.broadcast %60 : vector<2x16x1xi32> to vector<2x16x32xi32>
    %62 = arith.cmpi eq, %61, %5 : vector<2x16x32xi32>
    %63 = arith.ori %59, %62 : vector<2x16x32xi1>
    %cst_19 = arith.constant 1.000000e+00 : f32
    %cst_20 = arith.constant 0.000000e+00 : f32
    %64 = vector.broadcast %cst_19 : f32 to vector<2x16x32xf32>
    %65 = vector.broadcast %cst_20 : f32 to vector<2x16x32xf32>
    %66 = arith.select %63, %64, %65 : vector<2x16x32xi1>, vector<2x16x32xf32>
    %67 = arith.truncf %66 : vector<2x16x32xf32> to vector<2x16x32xbf16>
    "tpu.trace_start"() <{level = 10 : i32, message = "bns,bso->bno"}> : () -> ()
    %cst_21 = arith.constant dense<0.000000e+00> : vector<2x16x128xf32>
    %68 = tpu.matmul %67, %0, %cst_21 {dimension_numbers = #tpu.dot_dimension_numbers<[2], [1], [1], [2], [0, 0, 0, 1, 1, 2], [0], [0]>} : vector<2x16x32xbf16>, vector<2x32x128xbf16>, vector<2x16x128xf32> -> vector<2x16x128xf32>
    "tpu.trace_stop"() : () -> ()
    %69 = arith.maximumf %56, %68 : vector<2x16x128xf32>
    %70 = vector.extract_strided_slice %1 {offsets = [0, 0, 5], sizes = [2, 16, 1], strides = [1, 1, 1]} : vector<2x16x8xi32> to vector<2x16x1xi32>
    %71 = vector.broadcast %70 : vector<2x16x1xi32> to vector<2x16x32xi32>
    %72 = arith.cmpi eq, %71, %5 : vector<2x16x32xi32>
    %73 = vector.extract_strided_slice %4 {offsets = [0, 0, 5], sizes = [2, 16, 1], strides = [1, 1, 1]} : vector<2x16x8xi32> to vector<2x16x1xi32>
    %74 = vector.broadcast %73 : vector<2x16x1xi32> to vector<2x16x32xi32>
    %75 = arith.cmpi eq, %74, %5 : vector<2x16x32xi32>
    %76 = arith.ori %72, %75 : vector<2x16x32xi1>
    %cst_22 = arith.constant 1.000000e+00 : f32
    %cst_23 = arith.constant 0.000000e+00 : f32
    %77 = vector.broadcast %cst_22 : f32 to vector<2x16x32xf32>
    %78 = vector.broadcast %cst_23 : f32 to vector<2x16x32xf32>
    %79 = arith.select %76, %77, %78 : vector<2x16x32xi1>, vector<2x16x32xf32>
    %80 = arith.truncf %79 : vector<2x16x32xf32> to vector<2x16x32xbf16>
    "tpu.trace_start"() <{level = 10 : i32, message = "bns,bso->bno"}> : () -> ()
    %cst_24 = arith.constant dense<0.000000e+00> : vector<2x16x128xf32>
    %81 = tpu.matmul %80, %0, %cst_24 {dimension_numbers = #tpu.dot_dimension_numbers<[2], [1], [1], [2], [0, 0, 0, 1, 1, 2], [0], [0]>} : vector<2x16x32xbf16>, vector<2x32x128xbf16>, vector<2x16x128xf32> -> vector<2x16x128xf32>
    "tpu.trace_stop"() : () -> ()
    %82 = arith.maximumf %69, %81 : vector<2x16x128xf32>
    %83 = vector.extract_strided_slice %1 {offsets = [0, 0, 6], sizes = [2, 16, 1], strides = [1, 1, 1]} : vector<2x16x8xi32> to vector<2x16x1xi32>
    %84 = vector.broadcast %83 : vector<2x16x1xi32> to vector<2x16x32xi32>
    %85 = arith.cmpi eq, %84, %5 : vector<2x16x32xi32>
    %86 = vector.extract_strided_slice %4 {offsets = [0, 0, 6], sizes = [2, 16, 1], strides = [1, 1, 1]} : vector<2x16x8xi32> to vector<2x16x1xi32>
    %87 = vector.broadcast %86 : vector<2x16x1xi32> to vector<2x16x32xi32>
    %88 = arith.cmpi eq, %87, %5 : vector<2x16x32xi32>
    %89 = arith.ori %85, %88 : vector<2x16x32xi1>
    %cst_25 = arith.constant 1.000000e+00 : f32
    %cst_26 = arith.constant 0.000000e+00 : f32
    %90 = vector.broadcast %cst_25 : f32 to vector<2x16x32xf32>
    %91 = vector.broadcast %cst_26 : f32 to vector<2x16x32xf32>
    %92 = arith.select %89, %90, %91 : vector<2x16x32xi1>, vector<2x16x32xf32>
    %93 = arith.truncf %92 : vector<2x16x32xf32> to vector<2x16x32xbf16>
    "tpu.trace_start"() <{level = 10 : i32, message = "bns,bso->bno"}> : () -> ()
    %cst_27 = arith.constant dense<0.000000e+00> : vector<2x16x128xf32>
    %94 = tpu.matmul %93, %0, %cst_27 {dimension_numbers = #tpu.dot_dimension_numbers<[2], [1], [1], [2], [0, 0, 0, 1, 1, 2], [0], [0]>} : vector<2x16x32xbf16>, vector<2x32x128xbf16>, vector<2x16x128xf32> -> vector<2x16x128xf32>
    "tpu.trace_stop"() : () -> ()
    %95 = arith.maximumf %82, %94 : vector<2x16x128xf32>
    %96 = vector.extract_strided_slice %1 {offsets = [0, 0, 7], sizes = [2, 16, 1], strides = [1, 1, 1]} : vector<2x16x8xi32> to vector<2x16x1xi32>
    %97 = vector.broadcast %96 : vector<2x16x1xi32> to vector<2x16x32xi32>
    %98 = arith.cmpi eq, %97, %5 : vector<2x16x32xi32>
    %99 = vector.extract_strided_slice %4 {offsets = [0, 0, 7], sizes = [2, 16, 1], strides = [1, 1, 1]} : vector<2x16x8xi32> to vector<2x16x1xi32>
    %100 = vector.broadcast %99 : vector<2x16x1xi32> to vector<2x16x32xi32>
    %101 = arith.cmpi eq, %100, %5 : vector<2x16x32xi32>
    %102 = arith.ori %98, %101 : vector<2x16x32xi1>
    %cst_28 = arith.constant 1.000000e+00 : f32
    %cst_29 = arith.constant 0.000000e+00 : f32
    %103 = vector.broadcast %cst_28 : f32 to vector<2x16x32xf32>
    %104 = vector.broadcast %cst_29 : f32 to vector<2x16x32xf32>
    %105 = arith.select %102, %103, %104 : vector<2x16x32xi1>, vector<2x16x32xf32>
    %106 = arith.truncf %105 : vector<2x16x32xf32> to vector<2x16x32xbf16>
    "tpu.trace_start"() <{level = 10 : i32, message = "bns,bso->bno"}> : () -> ()
    %cst_30 = arith.constant dense<0.000000e+00> : vector<2x16x128xf32>
    %107 = tpu.matmul %106, %0, %cst_30 {dimension_numbers = #tpu.dot_dimension_numbers<[2], [1], [1], [2], [0, 0, 0, 1, 1, 2], [0], [0]>} : vector<2x16x32xbf16>, vector<2x32x128xbf16>, vector<2x16x128xf32> -> vector<2x16x128xf32>
    "tpu.trace_stop"() : () -> ()
    %108 = arith.maximumf %95, %107 : vector<2x16x128xf32>
    %c0_31 = arith.constant 0 : index
    %c0_32 = arith.constant 0 : index
    %109 = vector.load %arg5[%c0_31, %c0_32] : memref<1x128xf32, #tpu.memory_space<vmem>>, vector<1x128xf32>
    %110 = vector.shape_cast %109 : vector<1x128xf32> to vector<1x1x128xf32>
    %111 = vector.broadcast %110 : vector<1x1x128xf32> to vector<2x16x128xf32>
    %112 = arith.addf %108, %111 : vector<2x16x128xf32>
    %cst_33 = arith.constant 0.000000e+00 : f32
    %113 = vector.broadcast %cst_33 : f32 to vector<2x16x128xf32>
    %114 = arith.maximumf %112, %113 : vector<2x16x128xf32>
    %c0_34 = arith.constant 0 : index
    %c0_35 = arith.constant 0 : index
    %c0_36 = arith.constant 0 : index
    %115 = vector.load %arg6[%c0_34, %c0_35, %c0_36] : memref<2x16x128xf32, #tpu.memory_space<vmem>>, vector<2x16x128xf32>
    tpu.vector_store %arg6[%c0_34, %c0_35, %c0_36], %114 {strides = array<i32>} : memref<2x16x128xf32, #tpu.memory_space<vmem>>, vector<2x16x128xf32>,
    return
  }
  func.func @transform_0(%arg0: i32, %arg1: i32) -> (i32, i32, i32) {
    %c0_i32 = arith.constant 0 : i32
    %c0_i32_0 = arith.constant 0 : i32
    %c0_i32_1 = arith.constant 0 : i32
    return %arg0, %c0_i32, %c0_i32_0 : i32, i32, i32
  }
  func.func @transform_1(%arg0: i32, %arg1: i32) -> (i32, i32, i32) {
    %c0_i32 = arith.constant 0 : i32
    %c0_i32_0 = arith.constant 0 : i32
    return %arg0, %arg1, %c0_i32 : i32, i32, i32
  }
  func.func @transform_2(%arg0: i32, %arg1: i32) -> (i32, i32, i32) {
    %c0_i32 = arith.constant 0 : i32
    %c0_i32_0 = arith.constant 0 : i32
    return %arg0, %arg1, %c0_i32 : i32, i32, i32
  }
  func.func @transform_3(%arg0: i32, %arg1: i32) -> (i32, i32) {
    %c0_i32 = arith.constant 0 : i32
    %c0_i32_0 = arith.constant 0 : i32
    %c0_i32_1 = arith.constant 0 : i32
    return %c0_i32, %c0_i32_0 : i32, i32
  }
  func.func @transform_4(%arg0: i32, %arg1: i32) -> (i32, i32, i32) {
    %c0_i32 = arith.constant 0 : i32
    %c0_i32_0 = arith.constant 0 : i32
    return %arg0, %arg1, %c0_i32 : i32, i32, i32
  }
}

</mosaic_0001>

<llo_original>
// kernel: tpu_custom_call.1
$region0: #{tpu_custom_call.1}
  #allocation0 [shape = 'u32[]', space=smem, size = 0x4, offset = 0x4, fixed_abs, tag = 'smem constant byte address 0x4 - core index']
  #allocation1 [shape = 'u32[144,128]{1,0:T(1,128)}', space=vmem, size = 0x12000, scoped, tag = 'internal scratch']
  %s0 = inlined_call_operand.vmem [shape: bf16[2,32,128], index: 0, kind: input, shape index: {}]
  %s1 = inlined_call_operand.vmem [shape: s32[2,16,8], index: 1, kind: input, shape index: {}]
  %s2 = inlined_call_operand.vmem [shape: s32[2,16,8], index: 2, kind: input, shape index: {}]
  %s3 = inlined_call_operand.vmem [shape: f32[1,128], index: 3, kind: input, shape index: {}]
  %s4 = inlined_call_operand.hbm [shape: f32[2,16,128], index: 4, kind: output, shape index: {}]
  %s5 = sld [smem:[#allocation0]]
  $region26: #{tpu_custom_call.1} parent=0
    _
  %s7 = ssub.s32 1, %s5
  %s8 = scalar_select 0, %s7, %s5
  $region1: #{tpu_custom_call.1} parent=0
    #allocation2 [shape = 'u8[16384]{0}', space=vmem, size = 0x4000, scoped, tag = 'output window, operand 0, single buffered']
    #allocation3 [shape = 's32[1]{0}', space=sflag, size = 0x4, scoped, tag = 'scoped memory for tpu_custom_call.1']
    %9 = vsyncpa [#allocation3], 0
    // Predicated region
    $region2: #{tpu_custom_call.1} parent=1 // pred_check
      _
    $region3: #{tpu_custom_call.1} parent=1 // pred_check_branch
      %11 = sbr.rel (0) target = $region5
    $region4: #{tpu_custom_call.1} parent=1 // pred_region
      _
    $region5: #{tpu_custom_call.1} parent=1 // pred_fallthru
      _
    // Predicated region
    $region6: #{tpu_custom_call.1} parent=1 // pred_check
      _
    $region7: #{tpu_custom_call.1} parent=1 // pred_check_branch
      %13 = sbr.rel (0) target = $region9
    $region8: #{tpu_custom_call.1} parent=1 // pred_region
      _
    $region9: #{tpu_custom_call.1} parent=1 // pred_fallthru
      _
    // Predicated region
    $region10: #{tpu_custom_call.1} parent=1 // pred_check
      _
    $region11: #{tpu_custom_call.1} parent=1 // pred_check_branch
      %15 = sbr.rel (0) target = $region13
    $region12: #{tpu_custom_call.1} parent=1 // pred_region
      _
    $region13: #{tpu_custom_call.1} parent=1 // pred_fallthru
      _
    // Predicated region
    $region14: #{tpu_custom_call.1} parent=1 // pred_check
      _
    $region15: #{tpu_custom_call.1} parent=1 // pred_check_branch
      %17 = sbr.rel (0) target = $region17
    $region16: #{tpu_custom_call.1} parent=1 // pred_region
      _
    $region17: #{tpu_custom_call.1} parent=1 // pred_fallthru
      _
    %v19 = vld [vmem:[%s0] sm:$0xf]
    %v20 = vld [vmem:[%s0 + $0x4] sm:$0xf]
    %v21 = vld [vmem:[%s0 + $0x8] sm:$0xf]
    %v22 = vld [vmem:[%s0 + $0xc] sm:$0xf]
    %v23 = vld [vmem:[%s0 + $0x10] sm:$0xf]
    %v24 = vld [vmem:[%s0 + $0x14] sm:$0xf]
    %v25 = vld [vmem:[%s0 + $0x18] sm:$0xf]
    %v26 = vld [vmem:[%s0 + $0x1c] sm:$0xf]
    %v27 = vld [vmem:[%s1] sm:$0xff]
    %v28 = vld [vmem:[%s1 + $0x8] sm:$0xff]
    %v29 = vld [vmem:[%s1 + $0x10] sm:$0xff]
    %v30 = vld [vmem:[%s1 + $0x18] sm:$0xff]
    %v31 = vld [vmem:[%s2] sm:$0xff]
    %v32 = vld [vmem:[%s2 + $0x8] sm:$0xff]
    %v33 = vld [vmem:[%s2 + $0x10] sm:$0xff]
    %v34 = vld [vmem:[%s2 + $0x18] sm:$0xff]
    %v35 = vadd.s32 %v31, 16
    %v36 = vadd.s32 %v32, 16
    %v37 = vadd.s32 %v33, 16
    %v38 = vadd.s32 %v34, 16
    %v39 = vlaneseq
    %v40 = vand.u32 %v39, 127
    %41 = vset.pattern.permute.xlu0 0
    %42 = vperm.xlu0 %41, %v27
    %v43 = vpop.permute.xlu0 %42
    %44 = vset.pattern.permute.xlu0 0
    %45 = vperm.xlu0 %44, %v28
    %v46 = vpop.permute.xlu0 %45
    %47 = vset.pattern.permute.xlu0 0
    %48 = vperm.xlu0 %47, %v29
    %v49 = vpop.permute.xlu0 %48
    %50 = vset.pattern.permute.xlu0 0
    %51 = vperm.xlu0 %50, %v30
    %v52 = vpop.permute.xlu0 %51
    %vm53 = vcmp.eq.s32.totalorder %v43, %v40
    %vm54 = vcmp.eq.s32.totalorder %v46, %v40
    %vm55 = vcmp.eq.s32.totalorder %v49, %v40
    %vm56 = vcmp.eq.s32.totalorder %v52, %v40
    %57 = vset.pattern.permute.xlu0 0
    %58 = vperm.xlu0 %57, %v35
    %v59 = vpop.permute.xlu0 %58
    %60 = vset.pattern.permute.xlu0 0
    %61 = vperm.xlu0 %60, %v36
    %v62 = vpop.permute.xlu0 %61
    %63 = vset.pattern.permute.xlu0 0
    %64 = vperm.xlu0 %63, %v37
    %v65 = vpop.permute.xlu0 %64
    %66 = vset.pattern.permute.xlu0 0
    %67 = vperm.xlu0 %66, %v38
    %v68 = vpop.permute.xlu0 %67
    %vm69 = vcmp.eq.s32.totalorder %v59, %v40
    %vm70 = vcmp.eq.s32.totalorder %v62, %v40
    %vm71 = vcmp.eq.s32.totalorder %v65, %v40
    %vm72 = vcmp.eq.s32.totalorder %v68, %v40
    %vm73 = vmor %vm53, %vm69
    %vm74 = vmor %vm54, %vm70
    %vm75 = vmor %vm55, %vm71
    %vm76 = vmor %vm56, %vm72
    %v77 = vsel %vm73, 1.0, 0.0
    %v78 = vsel %vm74, 1.0, 0.0
    %v79 = vsel %vm75, 1.0, 0.0
    %v80 = vsel %vm76, 1.0, 0.0
    %v81 = vpack.c.bf16 %v78, %v77
    %v82 = vpack.c.bf16 %v80, %v79
    %v87 = vunpack.c.l.b16 %v19
    %v88 = vunpack.c.l.b16 %v20
    %v89 = vunpack.c.l.b16 %v21
    %v90 = vunpack.c.l.b16 %v22
    %v91 = vpack.c.b16 %v88, %v87
    %v92 = vpack.c.b16 %v90, %v89
    %vm95 = vcmask 261120
    %v97 = vsel %vm95, %v81, 0
    %99 = vmatprep.subr.bf16.mxu0 0
    %100 = vmatpush1.bf16.msra.mxu0 0
    %101 = vmatprep.subr.bf16.mxu0 0
    %102 = vmatpush1.bf16.msra.mxu0 0
    %103 = vmatprep.subr.bf16.mxu0 0
    %104 = vmatpush1.bf16.msra.mxu0 0
    %105 = vmatprep.subr.bf16.mxu0 0
    %106 = vmatpush1.bf16.msra.mxu0 0
    %107 = vmatprep.subr.bf16.mxu0 0
    %108 = vmatpush1.bf16.msra.mxu0 0
    %109 = vmatprep.subr.bf16.mxu0 0
    %110 = vmatpush1.bf16.msra.mxu0 0
    %111 = vmatprep.subr.bf16.mxu0 0
    %112 = vmatpush1.bf16.msra.mxu0 %v92
    %113 = vmatprep.subr.bf16.mxu0 0
    %114 = vmatpush1.bf16.msra.mxu0 %v91
    %115 = vmatprep.subr.bf16.mxu0 0
    %116 = vmatpush2.bf16.msra.mxu0 0
    %117 = vmatprep.subr.bf16.mxu0 0
    %118 = vmatpush2.bf16.msra.mxu0 0
    %119 = vmatprep.subr.bf16.mxu0 0
    %120 = vmatpush2.bf16.msra.mxu0 0
    %121 = vmatprep.subr.bf16.mxu0 0
    %122 = vmatpush2.bf16.msra.mxu0 0
    %123 = vmatprep.subr.bf16.mxu0 0
    %124 = vmatpush2.bf16.msra.mxu0 0
    %125 = vmatprep.subr.bf16.mxu0 0
    %126 = vmatpush2.bf16.msra.mxu0 0
    %127 = vmatprep.subr.bf16.mxu0 0
    %128 = vmatpush2.bf16.msra.mxu0 0
    %129 = vmatprep.subr.bf16.mxu0 0
    %130 = vmatpush2.bf16.msra.mxu0 0
    %131 = vmatprep.mubr.bf16.mxu0 0
    %132 = vmatmul.mubr.bf16.gmra.mxu0 %v97
    %v133 = vpop.f32.mrf.mxu0
    %v134 = vadd.f32 0.0, %v133
    %v135 = vpop.f32.mrf.mxu0
    %v136 = vpop.f32.mrf.mxu0
    %v137 = vadd.f32 0.0, %v136
    %v138 = vpop.f32.mrf.mxu0
    %139 = vdwg.mxu0
    %v144 = vunpack.c.l.b16 %v23
    %v145 = vunpack.c.l.b16 %v24
    %v146 = vunpack.c.l.b16 %v25
    %v147 = vunpack.c.l.b16 %v26
    %v148 = vpack.c.b16 %v145, %v144
    %v149 = vpack.c.b16 %v147, %v146
    %v153 = vsel %vm95, %v82, 0
    %155 = vmatprep.subr.bf16.mxu0 0
    %156 = vmatpush1.bf16.msra.mxu0 0
    %157 = vmatprep.subr.bf16.mxu0 0
    %158 = vmatpush1.bf16.msra.mxu0 0
    %159 = vmatprep.subr.bf16.mxu0 0
    %160 = vmatpush1.bf16.msra.mxu0 0
    %161 = vmatprep.subr.bf16.mxu0 0
    %162 = vmatpush1.bf16.msra.mxu0 0
    %163 = vmatprep.subr.bf16.mxu0 0
    %164 = vmatpush1.bf16.msra.mxu0 0
    %165 = vmatprep.subr.bf16.mxu0 0
    %166 = vmatpush1.bf16.msra.mxu0 0
    %167 = vmatprep.subr.bf16.mxu0 0
    %168 = vmatpush1.bf16.msra.mxu0 %v149
    %169 = vmatprep.subr.bf16.mxu0 0
    %170 = vmatpush1.bf16.msra.mxu0 %v148
    %171 = vmatprep.subr.bf16.mxu0 0
    %172 = vmatpush2.bf16.msra.mxu0 0
    %173 = vmatprep.subr.bf16.mxu0 0
    %174 = vmatpush2.bf16.msra.mxu0 0
    %175 = vmatprep.subr.bf16.mxu0 0
    %176 = vmatpush2.bf16.msra.mxu0 0
    %177 = vmatprep.subr.bf16.mxu0 0
    %178 = vmatpush2.bf16.msra.mxu0 0
    %179 = vmatprep.subr.bf16.mxu0 0
    %180 = vmatpush2.bf16.msra.mxu0 0
    %181 = vmatprep.subr.bf16.mxu0 0
    %182 = vmatpush2.bf16.msra.mxu0 0
    %183 = vmatprep.subr.bf16.mxu0 0
    %184 = vmatpush2.bf16.msra.mxu0 0
    %185 = vmatprep.subr.bf16.mxu0 0
    %186 = vmatpush2.bf16.msra.mxu0 0
    %187 = vmatprep.mubr.bf16.mxu0 0
    %188 = vmatmul.mubr.bf16.gmra.mxu0 %v153
    %v189 = vpop.f32.mrf.mxu0
    %v190 = vadd.f32 0.0, %v189
    %v191 = vpop.f32.mrf.mxu0
    %v192 = vpop.f32.mrf.mxu0
    %v193 = vadd.f32 0.0, %v192
    %v194 = vpop.f32.mrf.mxu0
    %195 = vdwg.mxu0
    %196 = vset.pattern.permute.xlu0 1
    %197 = vperm.xlu0 %196, %v27
    %v198 = vpop.permute.xlu0 %197
    %199 = vset.pattern.permute.xlu0 1
    %200 = vperm.xlu0 %199, %v28
    %v201 = vpop.permute.xlu0 %200
    %202 = vset.pattern.permute.xlu0 1
    %203 = vperm.xlu0 %202, %v29
    %v204 = vpop.permute.xlu0 %203
    %205 = vset.pattern.permute.xlu0 1
    %206 = vperm.xlu0 %205, %v30
    %v207 = vpop.permute.xlu0 %206
    %vm208 = vcmp.eq.s32.totalorder %v198, %v40
    %vm209 = vcmp.eq.s32.totalorder %v201, %v40
    %vm210 = vcmp.eq.s32.totalorder %v204, %v40
    %vm211 = vcmp.eq.s32.totalorder %v207, %v40
    %212 = vset.pattern.permute.xlu0 1
    %213 = vperm.xlu0 %212, %v35
    %v214 = vpop.permute.xlu0 %213
    %215 = vset.pattern.permute.xlu0 1
    %216 = vperm.xlu0 %215, %v36
    %v217 = vpop.permute.xlu0 %216
    %218 = vset.pattern.permute.xlu0 1
    %219 = vperm.xlu0 %218, %v37
    %v220 = vpop.permute.xlu0 %219
    %221 = vset.pattern.permute.xlu0 1
    %222 = vperm.xlu0 %221, %v38
    %v223 = vpop.permute.xlu0 %222
    %vm224 = vcmp.eq.s32.totalorder %v214, %v40
    %vm225 = vcmp.eq.s32.totalorder %v217, %v40
    %vm226 = vcmp.eq.s32.totalorder %v220, %v40
    %vm227 = vcmp.eq.s32.totalorder %v223, %v40
    %vm228 = vmor %vm208, %vm224
    %vm229 = vmor %vm209, %vm225
    %vm230 = vmor %vm210, %vm226
    %vm231 = vmor %vm211, %vm227
    %v232 = vsel %vm228, 1.0, 0.0
    %v233 = vsel %vm229, 1.0, 0.0
    %v234 = vsel %vm230, 1.0, 0.0
    %v235 = vsel %vm231, 1.0, 0.0
    %v236 = vpack.c.bf16 %v233, %v232
    %v237 = vpack.c.bf16 %v235, %v234
    %v239 = vsel %vm95, %v236, 0
    %241 = vmatprep.subr.bf16.mxu0 0
    %242 = vmatpush1.bf16.msra.mxu0 0
    %243 = vmatprep.subr.bf16.mxu0 0
    %244 = vmatpush1.bf16.msra.mxu0 0
    %245 = vmatprep.subr.bf16.mxu0 0
    %246 = vmatpush1.bf16.msra.mxu0 0
    %247 = vmatprep.subr.bf16.mxu0 0
    %248 = vmatpush1.bf16.msra.mxu0 0
    %249 = vmatprep.subr.bf16.mxu0 0
    %250 = vmatpush1.bf16.msra.mxu0 0
    %251 = vmatprep.subr.bf16.mxu0 0
    %252 = vmatpush1.bf16.msra.mxu0 0
    %253 = vmatprep.subr.bf16.mxu0 0
    %254 = vmatpush1.bf16.msra.mxu0 %v92
    %255 = vmatprep.subr.bf16.mxu0 0
    %256 = vmatpush1.bf16.msra.mxu0 %v91
    %257 = vmatprep.subr.bf16.mxu0 0
    %258 = vmatpush2.bf16.msra.mxu0 0
    %259 = vmatprep.subr.bf16.mxu0 0
    %260 = vmatpush2.bf16.msra.mxu0 0
    %261 = vmatprep.subr.bf16.mxu0 0
    %262 = vmatpush2.bf16.msra.mxu0 0
    %263 = vmatprep.subr.bf16.mxu0 0
    %264 = vmatpush2.bf16.msra.mxu0 0
    %265 = vmatprep.subr.bf16.mxu0 0
    %266 = vmatpush2.bf16.msra.mxu0 0
    %267 = vmatprep.subr.bf16.mxu0 0
    %268 = vmatpush2.bf16.msra.mxu0 0
    %269 = vmatprep.subr.bf16.mxu0 0
    %270 = vmatpush2.bf16.msra.mxu0 0
    %271 = vmatprep.subr.bf16.mxu0 0
    %272 = vmatpush2.bf16.msra.mxu0 0
    %273 = vmatprep.mubr.bf16.mxu0 0
    %274 = vmatmul.mubr.bf16.gmra.mxu0 %v239
    %v275 = vpop.f32.mrf.mxu0
    %v276 = vadd.f32 0.0, %v275
    %v277 = vpop.f32.mrf.mxu0
    %v278 = vpop.f32.mrf.mxu0
    %v279 = vadd.f32 0.0, %v278
    %v280 = vpop.f32.mrf.mxu0
    %281 = vdwg.mxu0
    %v283 = vsel %vm95, %v237, 0
    %285 = vmatprep.subr.bf16.mxu0 0
    %286 = vmatpush1.bf16.msra.mxu0 0
    %287 = vmatprep.subr.bf16.mxu0 0
    %288 = vmatpush1.bf16.msra.mxu0 0
    %289 = vmatprep.subr.bf16.mxu0 0
    %290 = vmatpush1.bf16.msra.mxu0 0
    %291 = vmatprep.subr.bf16.mxu0 0
    %292 = vmatpush1.bf16.msra.mxu0 0
    %293 = vmatprep.subr.bf16.mxu0 0
    %294 = vmatpush1.bf16.msra.mxu0 0
    %295 = vmatprep.subr.bf16.mxu0 0
    %296 = vmatpush1.bf16.msra.mxu0 0
    %297 = vmatprep.subr.bf16.mxu0 0
    %298 = vmatpush1.bf16.msra.mxu0 %v149
    %299 = vmatprep.subr.bf16.mxu0 0
    %300 = vmatpush1.bf16.msra.mxu0 %v148
    %301 = vmatprep.subr.bf16.mxu0 0
    %302 = vmatpush2.bf16.msra.mxu0 0
    %303 = vmatprep.subr.bf16.mxu0 0
    %304 = vmatpush2.bf16.msra.mxu0 0
    %305 = vmatprep.subr.bf16.mxu0 0
    %306 = vmatpush2.bf16.msra.mxu0 0
    %307 = vmatprep.subr.bf16.mxu0 0
    %308 = vmatpush2.bf16.msra.mxu0 0
    %309 = vmatprep.subr.bf16.mxu0 0
    %310 = vmatpush2.bf16.msra.mxu0 0
    %311 = vmatprep.subr.bf16.mxu0 0
    %312 = vmatpush2.bf16.msra.mxu0 0
    %313 = vmatprep.subr.bf16.mxu0 0
    %314 = vmatpush2.bf16.msra.mxu0 0
    %315 = vmatprep.subr.bf16.mxu0 0
    %316 = vmatpush2.bf16.msra.mxu0 0
    %317 = vmatprep.mubr.bf16.mxu0 0
    %318 = vmatmul.mubr.bf16.gmra.mxu0 %v283
    %v319 = vpop.f32.mrf.mxu0
    %v320 = vadd.f32 0.0, %v319
    %v321 = vpop.f32.mrf.mxu0
    %v322 = vpop.f32.mrf.mxu0
    %v323 = vadd.f32 0.0, %v322
    %v324 = vpop.f32.mrf.mxu0
    %325 = vdwg.mxu0
    %v326 = vmax.f32 %v134, %v276
    %v327 = vmax.f32 %v137, %v279
    %v328 = vmax.f32 %v190, %v320
    %v329 = vmax.f32 %v193, %v323
    %330 = vset.pattern.permute.xlu0 2
    %331 = vperm.xlu0 %330, %v27
    %v332 = vpop.permute.xlu0 %331
    %333 = vset.pattern.permute.xlu0 2
    %334 = vperm.xlu0 %333, %v28
    %v335 = vpop.permute.xlu0 %334
    %336 = vset.pattern.permute.xlu0 2
    %337 = vperm.xlu0 %336, %v29
    %v338 = vpop.permute.xlu0 %337
    %339 = vset.pattern.permute.xlu0 2
    %340 = vperm.xlu0 %339, %v30
    %v341 = vpop.permute.xlu0 %340
    %vm342 = vcmp.eq.s32.totalorder %v332, %v40
    %vm343 = vcmp.eq.s32.totalorder %v335, %v40
    %vm344 = vcmp.eq.s32.totalorder %v338, %v40
    %vm345 = vcmp.eq.s32.totalorder %v341, %v40
    %346 = vset.pattern.permute.xlu0 2
    %347 = vperm.xlu0 %346, %v35
    %v348 = vpop.permute.xlu0 %347
    %349 = vset.pattern.permute.xlu0 2
    %350 = vperm.xlu0 %349, %v36
    %v351 = vpop.permute.xlu0 %350
    %352 = vset.pattern.permute.xlu0 2
    %353 = vperm.xlu0 %352, %v37
    %v354 = vpop.permute.xlu0 %353
    %355 = vset.pattern.permute.xlu0 2
    %356 = vperm.xlu0 %355, %v38
    %v357 = vpop.permute.xlu0 %356
    %vm358 = vcmp.eq.s32.totalorder %v348, %v40
    %vm359 = vcmp.eq.s32.totalorder %v351, %v40
    %vm360 = vcmp.eq.s32.totalorder %v354, %v40
    %vm361 = vcmp.eq.s32.totalorder %v357, %v40
    %vm362 = vmor %vm342, %vm358
    %vm363 = vmor %vm343, %vm359
    %vm364 = vmor %vm344, %vm360
    %vm365 = vmor %vm345, %vm361
    %v366 = vsel %vm362, 1.0, 0.0
    %v367 = vsel %vm363, 1.0, 0.0
    %v368 = vsel %vm364, 1.0, 0.0
    %v369 = vsel %vm365, 1.0, 0.0
    %v370 = vpack.c.bf16 %v367, %v366
    %v371 = vpack.c.bf16 %v369, %v368
    %v373 = vsel %vm95, %v370, 0
    %375 = vmatprep.subr.bf16.mxu0 0
    %376 = vmatpush1.bf16.msra.mxu0 0
    %377 = vmatprep.subr.bf16.mxu0 0
    %378 = vmatpush1.bf16.msra.mxu0 0
    %379 = vmatprep.subr.bf16.mxu0 0
    %380 = vmatpush1.bf16.msra.mxu0 0
    %381 = vmatprep.subr.bf16.mxu0 0
    %382 = vmatpush1.bf16.msra.mxu0 0
    %383 = vmatprep.subr.bf16.mxu0 0
    %384 = vmatpush1.bf16.msra.mxu0 0
    %385 = vmatprep.subr.bf16.mxu0 0
    %386 = vmatpush1.bf16.msra.mxu0 0
    %387 = vmatprep.subr.bf16.mxu0 0
    %388 = vmatpush1.bf16.msra.mxu0 %v92
    %389 = vmatprep.subr.bf16.mxu0 0
    %390 = vmatpush1.bf16.msra.mxu0 %v91
    %391 = vmatprep.subr.bf16.mxu0 0
    %392 = vmatpush2.bf16.msra.mxu0 0
    %393 = vmatprep.subr.bf16.mxu0 0
    %394 = vmatpush2.bf16.msra.mxu0 0
    %395 = vmatprep.subr.bf16.mxu0 0
    %396 = vmatpush2.bf16.msra.mxu0 0
    %397 = vmatprep.subr.bf16.mxu0 0
    %398 = vmatpush2.bf16.msra.mxu0 0
    %399 = vmatprep.subr.bf16.mxu0 0
    %400 = vmatpush2.bf16.msra.mxu0 0
    %401 = vmatprep.subr.bf16.mxu0 0
    %402 = vmatpush2.bf16.msra.mxu0 0
    %403 = vmatprep.subr.bf16.mxu0 0
    %404 = vmatpush2.bf16.msra.mxu0 0
    %405 = vmatprep.subr.bf16.mxu0 0
    %406 = vmatpush2.bf16.msra.mxu0 0
    %407 = vmatprep.mubr.bf16.mxu0 0
    %408 = vmatmul.mubr.bf16.gmra.mxu0 %v373
    %v409 = vpop.f32.mrf.mxu0
    %v410 = vadd.f32 0.0, %v409
    %v411 = vpop.f32.mrf.mxu0
    %v412 = vpop.f32.mrf.mxu0
    %v413 = vadd.f32 0.0, %v412
    %v414 = vpop.f32.mrf.mxu0
    %415 = vdwg.mxu0
    %v417 = vsel %vm95, %v371, 0
    %419 = vmatprep.subr.bf16.mxu0 0
    %420 = vmatpush1.bf16.msra.mxu0 0
    %421 = vmatprep.subr.bf16.mxu0 0
    %422 = vmatpush1.bf16.msra.mxu0 0
    %423 = vmatprep.subr.bf16.mxu0 0
    %424 = vmatpush1.bf16.msra.mxu0 0
    %425 = vmatprep.subr.bf16.mxu0 0
    %426 = vmatpush1.bf16.msra.mxu0 0
    %427 = vmatprep.subr.bf16.mxu0 0
    %428 = vmatpush1.bf16.msra.mxu0 0
    %429 = vmatprep.subr.bf16.mxu0 0
    %430 = vmatpush1.bf16.msra.mxu0 0
    %431 = vmatprep.subr.bf16.mxu0 0
    %432 = vmatpush1.bf16.msra.mxu0 %v149
    %433 = vmatprep.subr.bf16.mxu0 0
    %434 = vmatpush1.bf16.msra.mxu0 %v148
    %435 = vmatprep.subr.bf16.mxu0 0
    %436 = vmatpush2.bf16.msra.mxu0 0
    %437 = vmatprep.subr.bf16.mxu0 0
    %438 = vmatpush2.bf16.msra.mxu0 0
    %439 = vmatprep.subr.bf16.mxu0 0
    %440 = vmatpush2.bf16.msra.mxu0 0
    %441 = vmatprep.subr.bf16.mxu0 0
    %442 = vmatpush2.bf16.msra.mxu0 0
    %443 = vmatprep.subr.bf16.mxu0 0
    %444 = vmatpush2.bf16.msra.mxu0 0
    %445 = vmatprep.subr.bf16.mxu0 0
    %446 = vmatpush2.bf16.msra.mxu0 0
    %447 = vmatprep.subr.bf16.mxu0 0
    %448 = vmatpush2.bf16.msra.mxu0 0
    %449 = vmatprep.subr.bf16.mxu0 0
    %450 = vmatpush2.bf16.msra.mxu0 0
    %451 = vmatprep.mubr.bf16.mxu0 0
    %452 = vmatmul.mubr.bf16.gmra.mxu0 %v417
    %v453 = vpop.f32.mrf.mxu0
    %v454 = vadd.f32 0.0, %v453
    %v455 = vpop.f32.mrf.mxu0
    %v456 = vpop.f32.mrf.mxu0
    %v457 = vadd.f32 0.0, %v456
    %v458 = vpop.f32.mrf.mxu0
    %459 = vdwg.mxu0
    %v460 = vmax.f32 %v326, %v410
    %v461 = vmax.f32 %v327, %v413
    %v462 = vmax.f32 %v328, %v454
    %v463 = vmax.f32 %v329, %v457
    %464 = vset.pattern.permute.xlu0 3
    %465 = vperm.xlu0 %464, %v27
    %v466 = vpop.permute.xlu0 %465
    %467 = vset.pattern.permute.xlu0 3
    %468 = vperm.xlu0 %467, %v28
    %v469 = vpop.permute.xlu0 %468
    %470 = vset.pattern.permute.xlu0 3
    %471 = vperm.xlu0 %470, %v29
    %v472 = vpop.permute.xlu0 %471
    %473 = vset.pattern.permute.xlu0 3
    %474 = vperm.xlu0 %473, %v30
    %v475 = vpop.permute.xlu0 %474
    %vm476 = vcmp.eq.s32.totalorder %v466, %v40
    %vm477 = vcmp.eq.s32.totalorder %v469, %v40
    %vm478 = vcmp.eq.s32.totalorder %v472, %v40
    %vm479 = vcmp.eq.s32.totalorder %v475, %v40
    %480 = vset.pattern.permute.xlu0 3
    %481 = vperm.xlu0 %480, %v35
    %v482 = vpop.permute.xlu0 %481
    %483 = vset.pattern.permute.xlu0 3
    %484 = vperm.xlu0 %483, %v36
    %v485 = vpop.permute.xlu0 %484
    %486 = vset.pattern.permute.xlu0 3
    %487 = vperm.xlu0 %486, %v37
    %v488 = vpop.permute.xlu0 %487
    %489 = vset.pattern.permute.xlu0 3
    %490 = vperm.xlu0 %489, %v38
    %v491 = vpop.permute.xlu0 %490
    %vm492 = vcmp.eq.s32.totalorder %v482, %v40
    %vm493 = vcmp.eq.s32.totalorder %v485, %v40
    %vm494 = vcmp.eq.s32.totalorder %v488, %v40
    %vm495 = vcmp.eq.s32.totalorder %v491, %v40
    %vm496 = vmor %vm476, %vm492
    %vm497 = vmor %vm477, %vm493
    %vm498 = vmor %vm478, %vm494
    %vm499 = vmor %vm479, %vm495
    %v500 = vsel %vm496, 1.0, 0.0
    %v501 = vsel %vm497, 1.0, 0.0
    %v502 = vsel %vm498, 1.0, 0.0
    %v503 = vsel %vm499, 1.0, 0.0
    %v504 = vpack.c.bf16 %v501, %v500
    %v505 = vpack.c.bf16 %v503, %v502
    %v507 = vsel %vm95, %v504, 0
    %509 = vmatprep.subr.bf16.mxu0 0
    %510 = vmatpush1.bf16.msra.mxu0 0
    %511 = vmatprep.subr.bf16.mxu0 0
    %512 = vmatpush1.bf16.msra.mxu0 0
    %513 = vmatprep.subr.bf16.mxu0 0
    %514 = vmatpush1.bf16.msra.mxu0 0
    %515 = vmatprep.subr.bf16.mxu0 0
    %516 = vmatpush1.bf16.msra.mxu0 0
    %517 = vmatprep.subr.bf16.mxu0 0
    %518 = vmatpush1.bf16.msra.mxu0 0
    %519 = vmatprep.subr.bf16.mxu0 0
    %520 = vmatpush1.bf16.msra.mxu0 0
    %521 = vmatprep.subr.bf16.mxu0 0
    %522 = vmatpush1.bf16.msra.mxu0 %v92
    %523 = vmatprep.subr.bf16.mxu0 0
    %524 = vmatpush1.bf16.msra.mxu0 %v91
    %525 = vmatprep.subr.bf16.mxu0 0
    %526 = vmatpush2.bf16.msra.mxu0 0
    %527 = vmatprep.subr.bf16.mxu0 0
    %528 = vmatpush2.bf16.msra.mxu0 0
    %529 = vmatprep.subr.bf16.mxu0 0
    %530 = vmatpush2.bf16.msra.mxu0 0
    %531 = vmatprep.subr.bf16.mxu0 0
    %532 = vmatpush2.bf16.msra.mxu0 0
    %533 = vmatprep.subr.bf16.mxu0 0
    %534 = vmatpush2.bf16.msra.mxu0 0
    %535 = vmatprep.subr.bf16.mxu0 0
    %536 = vmatpush2.bf16.msra.mxu0 0
    %537 = vmatprep.subr.bf16.mxu0 0
    %538 = vmatpush2.bf16.msra.mxu0 0
    %539 = vmatprep.subr.bf16.mxu0 0
    %540 = vmatpush2.bf16.msra.mxu0 0
    %541 = vmatprep.mubr.bf16.mxu0 0
    %542 = vmatmul.mubr.bf16.gmra.mxu0 %v507
    %v543 = vpop.f32.mrf.mxu0
    %v544 = vadd.f32 0.0, %v543
    %v545 = vpop.f32.mrf.mxu0
    %v546 = vpop.f32.mrf.mxu0
    %v547 = vadd.f32 0.0, %v546
    %v548 = vpop.f32.mrf.mxu0
    %549 = vdwg.mxu0
    %v551 = vsel %vm95, %v505, 0
    %553 = vmatprep.subr.bf16.mxu0 0
    %554 = vmatpush1.bf16.msra.mxu0 0
    %555 = vmatprep.subr.bf16.mxu0 0
    %556 = vmatpush1.bf16.msra.mxu0 0
    %557 = vmatprep.subr.bf16.mxu0 0
    %558 = vmatpush1.bf16.msra.mxu0 0
    %559 = vmatprep.subr.bf16.mxu0 0
    %560 = vmatpush1.bf16.msra.mxu0 0
    %561 = vmatprep.subr.bf16.mxu0 0
    %562 = vmatpush1.bf16.msra.mxu0 0
    %563 = vmatprep.subr.bf16.mxu0 0
    %564 = vmatpush1.bf16.msra.mxu0 0
    %565 = vmatprep.subr.bf16.mxu0 0
    %566 = vmatpush1.bf16.msra.mxu0 %v149
    %567 = vmatprep.subr.bf16.mxu0 0
    %568 = vmatpush1.bf16.msra.mxu0 %v148
    %569 = vmatprep.subr.bf16.mxu0 0
    %570 = vmatpush2.bf16.msra.mxu0 0
    %571 = vmatprep.subr.bf16.mxu0 0
    %572 = vmatpush2.bf16.msra.mxu0 0
    %573 = vmatprep.subr.bf16.mxu0 0
    %574 = vmatpush2.bf16.msra.mxu0 0
    %575 = vmatprep.subr.bf16.mxu0 0
    %576 = vmatpush2.bf16.msra.mxu0 0
    %577 = vmatprep.subr.bf16.mxu0 0
    %578 = vmatpush2.bf16.msra.mxu0 0
    %579 = vmatprep.subr.bf16.mxu0 0
    %580 = vmatpush2.bf16.msra.mxu0 0
    %581 = vmatprep.subr.bf16.mxu0 0
    %582 = vmatpush2.bf16.msra.mxu0 0
    %583 = vmatprep.subr.bf16.mxu0 0
    %584 = vmatpush2.bf16.msra.mxu0 0
    %585 = vmatprep.mubr.bf16.mxu0 0
    %586 = vmatmul.mubr.bf16.gmra.mxu0 %v551
    %v587 = vpop.f32.mrf.mxu0
    %v588 = vadd.f32 0.0, %v587
    %v589 = vpop.f32.mrf.mxu0
    %v590 = vpop.f32.mrf.mxu0
    %v591 = vadd.f32 0.0, %v590
    %v592 = vpop.f32.mrf.mxu0
    %593 = vdwg.mxu0
    %v594 = vmax.f32 %v460, %v544
    %v595 = vmax.f32 %v461, %v547
    %v596 = vmax.f32 %v462, %v588
    %v597 = vmax.f32 %v463, %v591
    %598 = vset.pattern.permute.xlu0 4
    %599 = vperm.xlu0 %598, %v27
    %v600 = vpop.permute.xlu0 %599
    %601 = vset.pattern.permute.xlu0 4
    %602 = vperm.xlu0 %601, %v28
    %v603 = vpop.permute.xlu0 %602
    %604 = vset.pattern.permute.xlu0 4
    %605 = vperm.xlu0 %604, %v29
    %v606 = vpop.permute.xlu0 %605
    %607 = vset.pattern.permute.xlu0 4
    %608 = vperm.xlu0 %607, %v30
    %v609 = vpop.permute.xlu0 %608
    %vm610 = vcmp.eq.s32.totalorder %v600, %v40
    %vm611 = vcmp.eq.s32.totalorder %v603, %v40
    %vm612 = vcmp.eq.s32.totalorder %v606, %v40
    %vm613 = vcmp.eq.s32.totalorder %v609, %v40
    %614 = vset.pattern.permute.xlu0 4
    %615 = vperm.xlu0 %614, %v35
    %v616 = vpop.permute.xlu0 %615
    %617 = vset.pattern.permute.xlu0 4
    %618 = vperm.xlu0 %617, %v36
    %v619 = vpop.permute.xlu0 %618
    %620 = vset.pattern.permute.xlu0 4
    %621 = vperm.xlu0 %620, %v37
    %v622 = vpop.permute.xlu0 %621
    %623 = vset.pattern.permute.xlu0 4
    %624 = vperm.xlu0 %623, %v38
    %v625 = vpop.permute.xlu0 %624
    %vm626 = vcmp.eq.s32.totalorder %v616, %v40
    %vm627 = vcmp.eq.s32.totalorder %v619, %v40
    %vm628 = vcmp.eq.s32.totalorder %v622, %v40
    %vm629 = vcmp.eq.s32.totalorder %v625, %v40
    %vm630 = vmor %vm610, %vm626
    %vm631 = vmor %vm611, %vm627
    %vm632 = vmor %vm612, %vm628
    %vm633 = vmor %vm613, %vm629
    %v634 = vsel %vm630, 1.0, 0.0
    %v635 = vsel %vm631, 1.0, 0.0
    %v636 = vsel %vm632, 1.0, 0.0
    %v637 = vsel %vm633, 1.0, 0.0
    %v638 = vpack.c.bf16 %v635, %v634
    %v639 = vpack.c.bf16 %v637, %v636
    %v641 = vsel %vm95, %v638, 0
    %643 = vmatprep.subr.bf16.mxu0 0
    %644 = vmatpush1.bf16.msra.mxu0 0
    %645 = vmatprep.subr.bf16.mxu0 0
    %646 = vmatpush1.bf16.msra.mxu0 0
    %647 = vmatprep.subr.bf16.mxu0 0
    %648 = vmatpush1.bf16.msra.mxu0 0
    %649 = vmatprep.subr.bf16.mxu0 0
    %650 = vmatpush1.bf16.msra.mxu0 0
    %651 = vmatprep.subr.bf16.mxu0 0
    %652 = vmatpush1.bf16.msra.mxu0 0
    %653 = vmatprep.subr.bf16.mxu0 0
    %654 = vmatpush1.bf16.msra.mxu0 0
    %655 = vmatprep.subr.bf16.mxu0 0
    %656 = vmatpush1.bf16.msra.mxu0 %v92
    %657 = vmatprep.subr.bf16.mxu0 0
    %658 = vmatpush1.bf16.msra.mxu0 %v91
    %659 = vmatprep.subr.bf16.mxu0 0
    %660 = vmatpush2.bf16.msra.mxu0 0
    %661 = vmatprep.subr.bf16.mxu0 0
    %662 = vmatpush2.bf16.msra.mxu0 0
    %663 = vmatprep.subr.bf16.mxu0 0
    %664 = vmatpush2.bf16.msra.mxu0 0
    %665 = vmatprep.subr.bf16.mxu0 0
    %666 = vmatpush2.bf16.msra.mxu0 0
    %667 = vmatprep.subr.bf16.mxu0 0
    %668 = vmatpush2.bf16.msra.mxu0 0
    %669 = vmatprep.subr.bf16.mxu0 0
    %670 = vmatpush2.bf16.msra.mxu0 0
    %671 = vmatprep.subr.bf16.mxu0 0
    %672 = vmatpush2.bf16.msra.mxu0 0
    %673 = vmatprep.subr.bf16.mxu0 0
    %674 = vmatpush2.bf16.msra.mxu0 0
    %675 = vmatprep.mubr.bf16.mxu0 0
    %676 = vmatmul.mubr.bf16.gmra.mxu0 %v641
    %v677 = vpop.f32.mrf.mxu0
    %v678 = vadd.f32 0.0, %v677
    %v679 = vpop.f32.mrf.mxu0
    %v680 = vpop.f32.mrf.mxu0
    %v681 = vadd.f32 0.0, %v680
    %v682 = vpop.f32.mrf.mxu0
    %683 = vdwg.mxu0
    %v685 = vsel %vm95, %v639, 0
    %687 = vmatprep.subr.bf16.mxu0 0
    %688 = vmatpush1.bf16.msra.mxu0 0
    %689 = vmatprep.subr.bf16.mxu0 0
    %690 = vmatpush1.bf16.msra.mxu0 0
    %691 = vmatprep.subr.bf16.mxu0 0
    %692 = vmatpush1.bf16.msra.mxu0 0
    %693 = vmatprep.subr.bf16.mxu0 0
    %694 = vmatpush1.bf16.msra.mxu0 0
    %695 = vmatprep.subr.bf16.mxu0 0
    %696 = vmatpush1.bf16.msra.mxu0 0
    %697 = vmatprep.subr.bf16.mxu0 0
    %698 = vmatpush1.bf16.msra.mxu0 0
    %699 = vmatprep.subr.bf16.mxu0 0
    %700 = vmatpush1.bf16.msra.mxu0 %v149
    %701 = vmatprep.subr.bf16.mxu0 0
    %702 = vmatpush1.bf16.msra.mxu0 %v148
    %703 = vmatprep.subr.bf16.mxu0 0
    %704 = vmatpush2.bf16.msra.mxu0 0
    %705 = vmatprep.subr.bf16.mxu0 0
    %706 = vmatpush2.bf16.msra.mxu0 0
    %707 = vmatprep.subr.bf16.mxu0 0
    %708 = vmatpush2.bf16.msra.mxu0 0
    %709 = vmatprep.subr.bf16.mxu0 0
    %710 = vmatpush2.bf16.msra.mxu0 0
    %711 = vmatprep.subr.bf16.mxu0 0
    %712 = vmatpush2.bf16.msra.mxu0 0
    %713 = vmatprep.subr.bf16.mxu0 0
    %714 = vmatpush2.bf16.msra.mxu0 0
    %715 = vmatprep.subr.bf16.mxu0 0
    %716 = vmatpush2.bf16.msra.mxu0 0
    %717 = vmatprep.subr.bf16.mxu0 0
    %718 = vmatpush2.bf16.msra.mxu0 0
    %719 = vmatprep.mubr.bf16.mxu0 0
    %720 = vmatmul.mubr.bf16.gmra.mxu0 %v685
    %v721 = vpop.f32.mrf.mxu0
    %v722 = vadd.f32 0.0, %v721
    %v723 = vpop.f32.mrf.mxu0
    %v724 = vpop.f32.mrf.mxu0
    %v725 = vadd.f32 0.0, %v724
    %v726 = vpop.f32.mrf.mxu0
    %727 = vdwg.mxu0
    %v728 = vmax.f32 %v594, %v678
    %v729 = vmax.f32 %v595, %v681
    %v730 = vmax.f32 %v596, %v722
    %v731 = vmax.f32 %v597, %v725
    %732 = vset.pattern.permute.xlu0 5
    %733 = vperm.xlu0 %732, %v27
    %v734 = vpop.permute.xlu0 %733
    %735 = vset.pattern.permute.xlu0 5
    %736 = vperm.xlu0 %735, %v28
    %v737 = vpop.permute.xlu0 %736
    %738 = vset.pattern.permute.xlu0 5
    %739 = vperm.xlu0 %738, %v29
    %v740 = vpop.permute.xlu0 %739
    %741 = vset.pattern.permute.xlu0 5
    %742 = vperm.xlu0 %741, %v30
    %v743 = vpop.permute.xlu0 %742
    %vm744 = vcmp.eq.s32.totalorder %v734, %v40
    %vm745 = vcmp.eq.s32.totalorder %v737, %v40
    %vm746 = vcmp.eq.s32.totalorder %v740, %v40
    %vm747 = vcmp.eq.s32.totalorder %v743, %v40
    %748 = vset.pattern.permute.xlu0 5
    %749 = vperm.xlu0 %748, %v35
    %v750 = vpop.permute.xlu0 %749
    %751 = vset.pattern.permute.xlu0 5
    %752 = vperm.xlu0 %751, %v36
    %v753 = vpop.permute.xlu0 %752
    %754 = vset.pattern.permute.xlu0 5
    %755 = vperm.xlu0 %754, %v37
    %v756 = vpop.permute.xlu0 %755
    %757 = vset.pattern.permute.xlu0 5
    %758 = vperm.xlu0 %757, %v38
    %v759 = vpop.permute.xlu0 %758
    %vm760 = vcmp.eq.s32.totalorder %v750, %v40
    %vm761 = vcmp.eq.s32.totalorder %v753, %v40
    %vm762 = vcmp.eq.s32.totalorder %v756, %v40
    %vm763 = vcmp.eq.s32.totalorder %v759, %v40
    %vm764 = vmor %vm744, %vm760
    %vm765 = vmor %vm745, %vm761
    %vm766 = vmor %vm746, %vm762
    %vm767 = vmor %vm747, %vm763
    %v768 = vsel %vm764, 1.0, 0.0
    %v769 = vsel %vm765, 1.0, 0.0
    %v770 = vsel %vm766, 1.0, 0.0
    %v771 = vsel %vm767, 1.0, 0.0
    %v772 = vpack.c.bf16 %v769, %v768
    %v773 = vpack.c.bf16 %v771, %v770
    %v775 = vsel %vm95, %v772, 0
    %777 = vmatprep.subr.bf16.mxu0 0
    %778 = vmatpush1.bf16.msra.mxu0 0
    %779 = vmatprep.subr.bf16.mxu0 0
    %780 = vmatpush1.bf16.msra.mxu0 0
    %781 = vmatprep.subr.bf16.mxu0 0
    %782 = vmatpush1.bf16.msra.mxu0 0
    %783 = vmatprep.subr.bf16.mxu0 0
    %784 = vmatpush1.bf16.msra.mxu0 0
    %785 = vmatprep.subr.bf16.mxu0 0
    %786 = vmatpush1.bf16.msra.mxu0 0
    %787 = vmatprep.subr.bf16.mxu0 0
    %788 = vmatpush1.bf16.msra.mxu0 0
    %789 = vmatprep.subr.bf16.mxu0 0
    %790 = vmatpush1.bf16.msra.mxu0 %v92
    %791 = vmatprep.subr.bf16.mxu0 0
    %792 = vmatpush1.bf16.msra.mxu0 %v91
    %793 = vmatprep.subr.bf16.mxu0 0
    %794 = vmatpush2.bf16.msra.mxu0 0
    %795 = vmatprep.subr.bf16.mxu0 0
    %796 = vmatpush2.bf16.msra.mxu0 0
    %797 = vmatprep.subr.bf16.mxu0 0
    %798 = vmatpush2.bf16.msra.mxu0 0
    %799 = vmatprep.subr.bf16.mxu0 0
    %800 = vmatpush2.bf16.msra.mxu0 0
    %801 = vmatprep.subr.bf16.mxu0 0
    %802 = vmatpush2.bf16.msra.mxu0 0
    %803 = vmatprep.subr.bf16.mxu0 0
    %804 = vmatpush2.bf16.msra.mxu0 0
    %805 = vmatprep.subr.bf16.mxu0 0
    %806 = vmatpush2.bf16.msra.mxu0 0
    %807 = vmatprep.subr.bf16.mxu0 0
    %808 = vmatpush2.bf16.msra.mxu0 0
    %809 = vmatprep.mubr.bf16.mxu0 0
    %810 = vmatmul.mubr.bf16.gmra.mxu0 %v775
    %v811 = vpop.f32.mrf.mxu0
    %v812 = vadd.f32 0.0, %v811
    %v813 = vpop.f32.mrf.mxu0
    %v814 = vpop.f32.mrf.mxu0
    %v815 = vadd.f32 0.0, %v814
    %v816 = vpop.f32.mrf.mxu0
    %817 = vdwg.mxu0
    %v819 = vsel %vm95, %v773, 0
    %821 = vmatprep.subr.bf16.mxu0 0
    %822 = vmatpush1.bf16.msra.mxu0 0
    %823 = vmatprep.subr.bf16.mxu0 0
    %824 = vmatpush1.bf16.msra.mxu0 0
    %825 = vmatprep.subr.bf16.mxu0 0
    %826 = vmatpush1.bf16.msra.mxu0 0
    %827 = vmatprep.subr.bf16.mxu0 0
    %828 = vmatpush1.bf16.msra.mxu0 0
    %829 = vmatprep.subr.bf16.mxu0 0
    %830 = vmatpush1.bf16.msra.mxu0 0
    %831 = vmatprep.subr.bf16.mxu0 0
    %832 = vmatpush1.bf16.msra.mxu0 0
    %833 = vmatprep.subr.bf16.mxu0 0
    %834 = vmatpush1.bf16.msra.mxu0 %v149
    %835 = vmatprep.subr.bf16.mxu0 0
    %836 = vmatpush1.bf16.msra.mxu0 %v148
    %837 = vmatprep.subr.bf16.mxu0 0
    %838 = vmatpush2.bf16.msra.mxu0 0
    %839 = vmatprep.subr.bf16.mxu0 0
    %840 = vmatpush2.bf16.msra.mxu0 0
    %841 = vmatprep.subr.bf16.mxu0 0
    %842 = vmatpush2.bf16.msra.mxu0 0
    %843 = vmatprep.subr.bf16.mxu0 0
    %844 = vmatpush2.bf16.msra.mxu0 0
    %845 = vmatprep.subr.bf16.mxu0 0
    %846 = vmatpush2.bf16.msra.mxu0 0
    %847 = vmatprep.subr.bf16.mxu0 0
    %848 = vmatpush2.bf16.msra.mxu0 0
    %849 = vmatprep.subr.bf16.mxu0 0
    %850 = vmatpush2.bf16.msra.mxu0 0
    %851 = vmatprep.subr.bf16.mxu0 0
    %852 = vmatpush2.bf16.msra.mxu0 0
    %853 = vmatprep.mubr.bf16.mxu0 0
    %854 = vmatmul.mubr.bf16.gmra.mxu0 %v819
    %v855 = vpop.f32.mrf.mxu0
    %v856 = vadd.f32 0.0, %v855
    %v857 = vpop.f32.mrf.mxu0
    %v858 = vpop.f32.mrf.mxu0
    %v859 = vadd.f32 0.0, %v858
    %v860 = vpop.f32.mrf.mxu0
    %861 = vdwg.mxu0
    %v862 = vmax.f32 %v728, %v812
    %v863 = vmax.f32 %v729, %v815
    %v864 = vmax.f32 %v730, %v856
    %v865 = vmax.f32 %v731, %v859
    %866 = vset.pattern.permute.xlu0 6
    %867 = vperm.xlu0 %866, %v27
    %v868 = vpop.permute.xlu0 %867
    %869 = vset.pattern.permute.xlu0 6
    %870 = vperm.xlu0 %869, %v28
    %v871 = vpop.permute.xlu0 %870
    %872 = vset.pattern.permute.xlu0 6
    %873 = vperm.xlu0 %872, %v29
    %v874 = vpop.permute.xlu0 %873
    %875 = vset.pattern.permute.xlu0 6
    %876 = vperm.xlu0 %875, %v30
    %v877 = vpop.permute.xlu0 %876
    %vm878 = vcmp.eq.s32.totalorder %v868, %v40
    %vm879 = vcmp.eq.s32.totalorder %v871, %v40
    %vm880 = vcmp.eq.s32.totalorder %v874, %v40
    %vm881 = vcmp.eq.s32.totalorder %v877, %v40
    %882 = vset.pattern.permute.xlu0 6
    %883 = vperm.xlu0 %882, %v35
    %v884 = vpop.permute.xlu0 %883
    %885 = vset.pattern.permute.xlu0 6
    %886 = vperm.xlu0 %885, %v36
    %v887 = vpop.permute.xlu0 %886
    %888 = vset.pattern.permute.xlu0 6
    %889 = vperm.xlu0 %888, %v37
    %v890 = vpop.permute.xlu0 %889
    %891 = vset.pattern.permute.xlu0 6
    %892 = vperm.xlu0 %891, %v38
    %v893 = vpop.permute.xlu0 %892
    %vm894 = vcmp.eq.s32.totalorder %v884, %v40
    %vm895 = vcmp.eq.s32.totalorder %v887, %v40
    %vm896 = vcmp.eq.s32.totalorder %v890, %v40
    %vm897 = vcmp.eq.s32.totalorder %v893, %v40
    %vm898 = vmor %vm878, %vm894
    %vm899 = vmor %vm879, %vm895
    %vm900 = vmor %vm880, %vm896
    %vm901 = vmor %vm881, %vm897
    %v902 = vsel %vm898, 1.0, 0.0
    %v903 = vsel %vm899, 1.0, 0.0
    %v904 = vsel %vm900, 1.0, 0.0
    %v905 = vsel %vm901, 1.0, 0.0
    %v906 = vpack.c.bf16 %v903, %v902
    %v907 = vpack.c.bf16 %v905, %v904
    %v909 = vsel %vm95, %v906, 0
    %911 = vmatprep.subr.bf16.mxu0 0
    %912 = vmatpush1.bf16.msra.mxu0 0
    %913 = vmatprep.subr.bf16.mxu0 0
    %914 = vmatpush1.bf16.msra.mxu0 0
    %915 = vmatprep.subr.bf16.mxu0 0
    %916 = vmatpush1.bf16.msra.mxu0 0
    %917 = vmatprep.subr.bf16.mxu0 0
    %918 = vmatpush1.bf16.msra.mxu0 0
    %919 = vmatprep.subr.bf16.mxu0 0
    %920 = vmatpush1.bf16.msra.mxu0 0
    %921 = vmatprep.subr.bf16.mxu0 0
    %922 = vmatpush1.bf16.msra.mxu0 0
    %923 = vmatprep.subr.bf16.mxu0 0
    %924 = vmatpush1.bf16.msra.mxu0 %v92
    %925 = vmatprep.subr.bf16.mxu0 0
    %926 = vmatpush1.bf16.msra.mxu0 %v91
    %927 = vmatprep.subr.bf16.mxu0 0
    %928 = vmatpush2.bf16.msra.mxu0 0
    %929 = vmatprep.subr.bf16.mxu0 0
    %930 = vmatpush2.bf16.msra.mxu0 0
    %931 = vmatprep.subr.bf16.mxu0 0
    %932 = vmatpush2.bf16.msra.mxu0 0
    %933 = vmatprep.subr.bf16.mxu0 0
    %934 = vmatpush2.bf16.msra.mxu0 0
    %935 = vmatprep.subr.bf16.mxu0 0
    %936 = vmatpush2.bf16.msra.mxu0 0
    %937 = vmatprep.subr.bf16.mxu0 0
    %938 = vmatpush2.bf16.msra.mxu0 0
    %939 = vmatprep.subr.bf16.mxu0 0
    %940 = vmatpush2.bf16.msra.mxu0 0
    %941 = vmatprep.subr.bf16.mxu0 0
    %942 = vmatpush2.bf16.msra.mxu0 0
    %943 = vmatprep.mubr.bf16.mxu0 0
    %944 = vmatmul.mubr.bf16.gmra.mxu0 %v909
    %v945 = vpop.f32.mrf.mxu0
    %v946 = vadd.f32 0.0, %v945
    %v947 = vpop.f32.mrf.mxu0
    %v948 = vpop.f32.mrf.mxu0
    %v949 = vadd.f32 0.0, %v948
    %v950 = vpop.f32.mrf.mxu0
    %951 = vdwg.mxu0
    %v953 = vsel %vm95, %v907, 0
    %955 = vmatprep.subr.bf16.mxu0 0
    %956 = vmatpush1.bf16.msra.mxu0 0
    %957 = vmatprep.subr.bf16.mxu0 0
    %958 = vmatpush1.bf16.msra.mxu0 0
    %959 = vmatprep.subr.bf16.mxu0 0
    %960 = vmatpush1.bf16.msra.mxu0 0
    %961 = vmatprep.subr.bf16.mxu0 0
    %962 = vmatpush1.bf16.msra.mxu0 0
    %963 = vmatprep.subr.bf16.mxu0 0
    %964 = vmatpush1.bf16.msra.mxu0 0
    %965 = vmatprep.subr.bf16.mxu0 0
    %966 = vmatpush1.bf16.msra.mxu0 0
    %967 = vmatprep.subr.bf16.mxu0 0
    %968 = vmatpush1.bf16.msra.mxu0 %v149
    %969 = vmatprep.subr.bf16.mxu0 0
    %970 = vmatpush1.bf16.msra.mxu0 %v148
    %971 = vmatprep.subr.bf16.mxu0 0
    %972 = vmatpush2.bf16.msra.mxu0 0
    %973 = vmatprep.subr.bf16.mxu0 0
    %974 = vmatpush2.bf16.msra.mxu0 0
    %975 = vmatprep.subr.bf16.mxu0 0
    %976 = vmatpush2.bf16.msra.mxu0 0
    %977 = vmatprep.subr.bf16.mxu0 0
    %978 = vmatpush2.bf16.msra.mxu0 0
    %979 = vmatprep.subr.bf16.mxu0 0
    %980 = vmatpush2.bf16.msra.mxu0 0
    %981 = vmatprep.subr.bf16.mxu0 0
    %982 = vmatpush2.bf16.msra.mxu0 0
    %983 = vmatprep.subr.bf16.mxu0 0
    %984 = vmatpush2.bf16.msra.mxu0 0
    %985 = vmatprep.subr.bf16.mxu0 0
    %986 = vmatpush2.bf16.msra.mxu0 0
    %987 = vmatprep.mubr.bf16.mxu0 0
    %988 = vmatmul.mubr.bf16.gmra.mxu0 %v953
    %v989 = vpop.f32.mrf.mxu0
    %v990 = vadd.f32 0.0, %v989
    %v991 = vpop.f32.mrf.mxu0
    %v992 = vpop.f32.mrf.mxu0
    %v993 = vadd.f32 0.0, %v992
    %v994 = vpop.f32.mrf.mxu0
    %995 = vdwg.mxu0
    %v996 = vmax.f32 %v862, %v946
    %v997 = vmax.f32 %v863, %v949
    %v998 = vmax.f32 %v864, %v990
    %v999 = vmax.f32 %v865, %v993
    %1000 = vset.pattern.permute.xlu0 7
    %1001 = vperm.xlu0 %1000, %v27
    %v1002 = vpop.permute.xlu0 %1001
    %1003 = vset.pattern.permute.xlu0 7
    %1004 = vperm.xlu0 %1003, %v28
    %v1005 = vpop.permute.xlu0 %1004
    %1006 = vset.pattern.permute.xlu0 7
    %1007 = vperm.xlu0 %1006, %v29
    %v1008 = vpop.permute.xlu0 %1007
    %1009 = vset.pattern.permute.xlu0 7
    %1010 = vperm.xlu0 %1009, %v30
    %v1011 = vpop.permute.xlu0 %1010
    %vm1012 = vcmp.eq.s32.totalorder %v1002, %v40
    %vm1013 = vcmp.eq.s32.totalorder %v1005, %v40
    %vm1014 = vcmp.eq.s32.totalorder %v1008, %v40
    %vm1015 = vcmp.eq.s32.totalorder %v1011, %v40
    %1016 = vset.pattern.permute.xlu0 7
    %1017 = vperm.xlu0 %1016, %v35
    %v1018 = vpop.permute.xlu0 %1017
    %1019 = vset.pattern.permute.xlu0 7
    %1020 = vperm.xlu0 %1019, %v36
    %v1021 = vpop.permute.xlu0 %1020
    %1022 = vset.pattern.permute.xlu0 7
    %1023 = vperm.xlu0 %1022, %v37
    %v1024 = vpop.permute.xlu0 %1023
    %1025 = vset.pattern.permute.xlu0 7
    %1026 = vperm.xlu0 %1025, %v38
    %v1027 = vpop.permute.xlu0 %1026
    %vm1028 = vcmp.eq.s32.totalorder %v1018, %v40
    %vm1029 = vcmp.eq.s32.totalorder %v1021, %v40
    %vm1030 = vcmp.eq.s32.totalorder %v1024, %v40
    %vm1031 = vcmp.eq.s32.totalorder %v1027, %v40
    %vm1032 = vmor %vm1012, %vm1028
    %vm1033 = vmor %vm1013, %vm1029
    %vm1034 = vmor %vm1014, %vm1030
    %vm1035 = vmor %vm1015, %vm1031
    %v1036 = vsel %vm1032, 1.0, 0.0
    %v1037 = vsel %vm1033, 1.0, 0.0
    %v1038 = vsel %vm1034, 1.0, 0.0
    %v1039 = vsel %vm1035, 1.0, 0.0
    %v1040 = vpack.c.bf16 %v1037, %v1036
    %v1041 = vpack.c.bf16 %v1039, %v1038
    %v1043 = vsel %vm95, %v1040, 0
    %1045 = vmatprep.subr.bf16.mxu0 0
    %1046 = vmatpush1.bf16.msra.mxu0 0
    %1047 = vmatprep.subr.bf16.mxu0 0
    %1048 = vmatpush1.bf16.msra.mxu0 0
    %1049 = vmatprep.subr.bf16.mxu0 0
    %1050 = vmatpush1.bf16.msra.mxu0 0
    %1051 = vmatprep.subr.bf16.mxu0 0
    %1052 = vmatpush1.bf16.msra.mxu0 0
    %1053 = vmatprep.subr.bf16.mxu0 0
    %1054 = vmatpush1.bf16.msra.mxu0 0
    %1055 = vmatprep.subr.bf16.mxu0 0
    %1056 = vmatpush1.bf16.msra.mxu0 0
    %1057 = vmatprep.subr.bf16.mxu0 0
    %1058 = vmatpush1.bf16.msra.mxu0 %v92
    %1059 = vmatprep.subr.bf16.mxu0 0
    %1060 = vmatpush1.bf16.msra.mxu0 %v91
    %1061 = vmatprep.subr.bf16.mxu0 0
    %1062 = vmatpush2.bf16.msra.mxu0 0
    %1063 = vmatprep.subr.bf16.mxu0 0
    %1064 = vmatpush2.bf16.msra.mxu0 0
    %1065 = vmatprep.subr.bf16.mxu0 0
    %1066 = vmatpush2.bf16.msra.mxu0 0
    %1067 = vmatprep.subr.bf16.mxu0 0
    %1068 = vmatpush2.bf16.msra.mxu0 0
    %1069 = vmatprep.subr.bf16.mxu0 0
    %1070 = vmatpush2.bf16.msra.mxu0 0
    %1071 = vmatprep.subr.bf16.mxu0 0
    %1072 = vmatpush2.bf16.msra.mxu0 0
    %1073 = vmatprep.subr.bf16.mxu0 0
    %1074 = vmatpush2.bf16.msra.mxu0 0
    %1075 = vmatprep.subr.bf16.mxu0 0
    %1076 = vmatpush2.bf16.msra.mxu0 0
    %1077 = vmatprep.mubr.bf16.mxu0 0
    %1078 = vmatmul.mubr.bf16.gmra.mxu0 %v1043
    %v1079 = vpop.f32.mrf.mxu0
    %v1080 = vadd.f32 0.0, %v1079
    %v1081 = vpop.f32.mrf.mxu0
    %v1082 = vpop.f32.mrf.mxu0
    %v1083 = vadd.f32 0.0, %v1082
    %v1084 = vpop.f32.mrf.mxu0
    %1085 = vdwg.mxu0
    %v1087 = vsel %vm95, %v1041, 0
    %1089 = vmatprep.subr.bf16.mxu0 0
    %1090 = vmatpush1.bf16.msra.mxu0 0
    %1091 = vmatprep.subr.bf16.mxu0 0
    %1092 = vmatpush1.bf16.msra.mxu0 0
    %1093 = vmatprep.subr.bf16.mxu0 0
    %1094 = vmatpush1.bf16.msra.mxu0 0
    %1095 = vmatprep.subr.bf16.mxu0 0
    %1096 = vmatpush1.bf16.msra.mxu0 0
    %1097 = vmatprep.subr.bf16.mxu0 0
    %1098 = vmatpush1.bf16.msra.mxu0 0
    %1099 = vmatprep.subr.bf16.mxu0 0
    %1100 = vmatpush1.bf16.msra.mxu0 0
    %1101 = vmatprep.subr.bf16.mxu0 0
    %1102 = vmatpush1.bf16.msra.mxu0 %v149
    %1103 = vmatprep.subr.bf16.mxu0 0
    %1104 = vmatpush1.bf16.msra.mxu0 %v148
    %1105 = vmatprep.subr.bf16.mxu0 0
    %1106 = vmatpush2.bf16.msra.mxu0 0
    %1107 = vmatprep.subr.bf16.mxu0 0
    %1108 = vmatpush2.bf16.msra.mxu0 0
    %1109 = vmatprep.subr.bf16.mxu0 0
    %1110 = vmatpush2.bf16.msra.mxu0 0
    %1111 = vmatprep.subr.bf16.mxu0 0
    %1112 = vmatpush2.bf16.msra.mxu0 0
    %1113 = vmatprep.subr.bf16.mxu0 0
    %1114 = vmatpush2.bf16.msra.mxu0 0
    %1115 = vmatprep.subr.bf16.mxu0 0
    %1116 = vmatpush2.bf16.msra.mxu0 0
    %1117 = vmatprep.subr.bf16.mxu0 0
    %1118 = vmatpush2.bf16.msra.mxu0 0
    %1119 = vmatprep.subr.bf16.mxu0 0
    %1120 = vmatpush2.bf16.msra.mxu0 0
    %1121 = vmatprep.mubr.bf16.mxu0 0
    %1122 = vmatmul.mubr.bf16.gmra.mxu0 %v1087
    %v1123 = vpop.f32.mrf.mxu0
    %v1124 = vadd.f32 0.0, %v1123
    %v1125 = vpop.f32.mrf.mxu0
    %v1126 = vpop.f32.mrf.mxu0
    %v1127 = vadd.f32 0.0, %v1126
    %v1128 = vpop.f32.mrf.mxu0
    %1129 = vdwg.mxu0
    %v1130 = vmax.f32 %v996, %v1080
    %v1131 = vmax.f32 %v997, %v1083
    %v1132 = vmax.f32 %v998, %v1124
    %v1133 = vmax.f32 %v999, %v1127
    %v1134 = vld [vmem:[%s3] sm:$0x1]
    %v1136 = vlaneseq
    %v1137 = vshrl.u32 %v1136, 7
    %v1138 = vsub.s32 0, %v1137
    %v1139 = vrot.slane %v1134, %v1138
    %v1141 = vadd.f32 %v1130, %v1139
    %v1142 = vadd.f32 %v1131, %v1139
    %v1143 = vadd.f32 %v1132, %v1139
    %v1144 = vadd.f32 %v1133, %v1139
    %v1145 = vmax.f32 %v1141, 0.0
    %v1146 = vmax.f32 %v1142, 0.0
    %v1147 = vmax.f32 %v1143, 0.0
    %v1148 = vmax.f32 %v1144, 0.0
    %1149 = vst [vmem:[#allocation2] sm:$0xff] %v1145
    %1150 = vst [vmem:[#allocation2 + $0x8] sm:$0xff] %v1146
    %1151 = vst [vmem:[#allocation2 + $0x10] sm:$0xff] %v1147
    %1152 = vst [vmem:[#allocation2 + $0x18] sm:$0xff] %v1148
    // Predicated region
    $region18: #{tpu_custom_call.1} parent=1 // pred_check
      _
    $region19: #{tpu_custom_call.1} parent=1 // pred_check_branch
      %1154 = sbr.rel (0) target = $region21
    $region20: #{tpu_custom_call.1} parent=1 // pred_region
      %s1156 = ssub.s32 512, 512
      %1157 = vsyncadd [#allocation3], %s1156
      %s1158 = sshll.u32 [#allocation2], 4
      %s1159 = int_to_ptr.vmem [resolvable:$true] %s1158
      %1164 = dma.vmem_to_hbm [thread:$0]  %s1159, 512, %s4, [#allocation3], 128, 128, 8
    $region21: #{tpu_custom_call.1} parent=1 // pred_fallthru
      _
    // Predicated region
    $region22: #{tpu_custom_call.1} parent=1 // pred_check
      _
    $region23: #{tpu_custom_call.1} parent=1 // pred_check_branch
      %1166 = sbr.rel (0) target = $region25
    $region24: #{tpu_custom_call.1} parent=1 // pred_region
      %1167 = dma.done [#allocation3], 512
    $region25: #{tpu_custom_call.1} parent=1 // pred_fallthru
      _
    %1168 = vsyncpa [#allocation3], 1

</llo_original>
